<compile_context>
chip_gen: v5e
topology: v5e:2x2
jax: 0.10.0
libtpu: 0.0.40
codegen_flags: <defaults>
</compile_context>

<pallas_src>
import math

import jax
import jax.numpy as jnp
from jax.experimental import pallas as pl
from jax.experimental.pallas import tpu as pltpu


_VMEM_LIMIT_BYTES = 32 << 20  # explicit scoped-VMEM budget, safe on v5e/v6e/v7x


def _build_pe(size: int, max_len: int, dtype=jnp.float32) -> jnp.ndarray:
    """Sinusoidal positional-encoding buffer [max_len, size]
    (mirrors the PyTorch __init__: even lanes = sin, odd lanes = cos).
    Pass dtype=jnp.bfloat16 for bf16 activations to halve pe's HBM stream
    (results then differ from the f32 PyTorch buffer at bf16 epsilon)."""
    if size % 2 != 0:
        raise ValueError(
            f"Cannot use sin/cos positional encoding with odd dim (got dim={size})")
    position = jnp.arange(0, max_len, dtype=jnp.float32)[:, None]            # [max_len, 1]
    div_term = jnp.exp(
        jnp.arange(0, size, 2, dtype=jnp.float32) * -(math.log(10000.0) / size)
    )                                                                         # [size//2]
    angles = position * div_term                                              # [max_len, size//2]
    pe = jnp.stack([jnp.sin(angles), jnp.cos(angles)], axis=-1).reshape(max_len, size)
    return pe.astype(dtype)


def _add_pe_kernel(emb_ref, pe_ref, out_ref):
    # tiled path: emb_ref (1, TS, TD), pe_ref (TS, TD)
    # flat  path: emb_ref (B, 1, TL), pe_ref (1, TL)
    # Add happens in the promoted dtype (keeps full pe precision), cast once on store.
    out_ref[...] = (emb_ref[...] + pe_ref[...]).astype(out_ref.dtype)


def _default_tiles():
    """Per-stream block sizing: 2 MiB/stream everywhere, 4 MiB/stream on v7x."""
    seq_tile, feat_tile = 512, 1024            # 512*1024*4B = 2 MiB (f32)
    try:
        info = pltpu.get_tpu_info()
        vmem = getattr(info, "vmem_capacity_bytes", 0)
        if vmem and vmem <= (64 << 20):
            # v7x (64 MiB VMEM, ~3.2 TB/s HBM): bigger blocks amortize the
            # ~0.35 us fixed per-grid-step overhead; 6 x 4 MiB double-buffered
            # = 24 MiB, inside the 32 MiB limit.
            seq_tile = 1024
    except Exception:
        pass
    return seq_tile, feat_tile


def _forward_tiled(emb, pe, seq_tile, feat_tile, donate_emb):
    """D multiple of 128, S multiple of 8: tile S and D, batch innermost so the
    pe tile stays VMEM-resident (DMA elided) across the batch loop."""
    B, S, D = emb.shape
    TS = min(seq_tile, S)     # multiple of 8   (seq_tile and S both are)
    TD = min(feat_tile, D)    # multiple of 128 (feat_tile and D both are)
    grid = (pl.cdiv(S, TS), pl.cdiv(D, TD), B)   # batch INNERMOST
    return pl.pallas_call(
        _add_pe_kernel,
        out_shape=jax.ShapeDtypeStruct((B, S, D), emb.dtype),
        grid_spec=pltpu.PrefetchScalarGridSpec(
            num_scalar_prefetch=0,
            grid=grid,
            in_specs=[
                pl.BlockSpec((1, TS, TD), lambda s, d, b: (b, s, d)),
                # Index straight into the full [max_len, D] buffer; block index
                # (s, d) is constant across consecutive b steps -> fetched once.
                pl.BlockSpec((TS, TD), lambda s, d, b: (s, d)),
            ],
            out_specs=pl.BlockSpec((1, TS, TD), lambda s, d, b: (b, s, d)),
        ),
        compiler_params=pltpu.CompilerParams(
            # Long s/d axes outermost get sharded across TensorCores; batch is
            # the sequential "arbitrary" axis that reuses the resident pe tile.
            dimension_semantics=("parallel", "parallel", "arbitrary"),
            vmem_limit_bytes=_VMEM_LIMIT_BYTES,
        ),
        input_output_aliases=({0: 0} if donate_emb else {}),
    )(emb, pe)


def _forward_flat(emb, pe, lane_tile, donate_emb):
    """Small / unaligned D: fold (S, D) -> S*D so stores are lane-dense and fold
    batch into the block so tiny shapes run in a single grid step."""
    B, S, D = emb.shape
    max_len = pe.shape[0]
    L = S * D
    emb_flat = emb.reshape(B, 1, L)

    if L % 128 == 0:
        # Free, contiguous reshape of the full buffer; the BlockSpec only DMAs
        # the prefix blocks that the grid touches -> no pe[:S] slice in HBM.
        pe_src = pe.reshape(1, max_len * D)
    else:
        # TODO(synk): unaligned S*D needs a tiny wrapper-side prefix copy so the
        # block can span the full last dim; dtype cast still done in-kernel.
        pe_src = pe[:S, :].reshape(1, L)

    # Bound the per-step emb/out block to ~2 MiB even with batch folded in.
    itemsize = jnp.dtype(emb.dtype).itemsize
    budget = max(128, ((2 << 20) // (B * itemsize)) // 128 * 128)
    TL = min(lane_tile, budget)   # multiple of 128
    if TL >= L:
        TL = L                    # single step; TL == full last dim is legal
    grid = (pl.cdiv(L, TL),)

    out_flat = pl.pallas_call(
        _add_pe_kernel,
        out_shape=jax.ShapeDtypeStruct((B, 1, L), emb.dtype),
        grid_spec=pltpu.PrefetchScalarGridSpec(
            num_scalar_prefetch=0,
            grid=grid,
            in_specs=[
                pl.BlockSpec((B, 1, TL), lambda l: (0, 0, l)),
                pl.BlockSpec((1, TL), lambda l: (0, l)),
            ],
            out_specs=pl.BlockSpec((B, 1, TL), lambda l: (0, 0, l)),
        ),
        compiler_params=pltpu.CompilerParams(
            dimension_semantics=("parallel",),
            vmem_limit_bytes=_VMEM_LIMIT_BYTES,
        ),
        input_output_aliases=({0: 0} if donate_emb else {}),
    )(emb_flat, pe_src)
    return out_flat.reshape(B, S, D)


def positional_encoding_forward(
    emb: jnp.ndarray,
    pe: jnp.ndarray,
    *,
    seq_tile: int | None = None,     # multiple of 8   (None -> auto per chip)
    feat_tile: int | None = None,    # multiple of 128 (None -> auto per chip)
    lane_tile: int = 256 * 1024,     # multiple of 128
    donate_emb: bool = False,        # alias emb buffer to the output
) -> jnp.ndarray:
    """emb: [B, S, D], pe: [max_len, D]  ->  [B, S, D]  (emb + pe[:S])."""
    B, S, D = emb.shape
    max_len, pe_dim = pe.shape
    if pe_dim != D:
        raise ValueError(f"pe feature dim {pe_dim} != emb feature dim {D}")
    if S > max_len:
        raise ValueError(f"sequence length {S} exceeds max_len {max_len}")

    auto_seq, auto_feat = _default_tiles()
    seq_tile = auto_seq if seq_tile is None else seq_tile
    feat_tile = auto_feat if feat_tile is None else feat_tile
    assert seq_tile % 8 == 0 and feat_tile % 128 == 0 and lane_tile % 128 == 0

    # TODO(synk): for truly tiny S*D this standalone kernel is launch-overhead
    # dominated; in a real model, let XLA fuse the add into the adjacent op.
    if D % 128 == 0 and S % 8 == 0:
        return _forward_tiled(emb, pe, seq_tile, feat_tile, donate_emb)
    return _forward_flat(emb, pe, lane_tile, donate_emb)


if __name__ == "__main__":
    key = jax.random.PRNGKey(0)

    # --- primary test: module-like small shapes (exercises the flat path) ---
    B, S, D = 2, 8, 32
    max_len = 200000  # module default
    k1, k2 = jax.random.split(key)
    emb = jax.random.normal(k1, (B, S, D), dtype=jnp.float32)
    pe = _build_pe(size=D, max_len=max_len, dtype=jnp.float32)

    out = positional_encoding_forward(emb, pe)
    out = jax.block_until_ready(out)
    ref = emb + pe[None, :S, :]
    assert out.shape == (B, S, D)
    assert jnp.allclose(out, ref, atol=1e-6), "mismatch vs reference (flat path)"

    # --- secondary test: lane-aligned shapes (exercises the tiled path) ---
    B2, S2, D2 = 2, 16, 128
    emb2 = jax.random.normal(k2, (B2, S2, D2), dtype=jnp.float32)
    pe2 = _build_pe(size=D2, max_len=4096, dtype=jnp.float32)

    out2 = positional_encoding_forward(emb2, pe2)
    out2 = jax.block_until_ready(out2)
    ref2 = emb2 + pe2[None, :S2, :]
    assert out2.shape == (B2, S2, D2)
    assert jnp.allclose(out2, ref2, atol=1e-6), "mismatch vs reference (tiled path)"

    print("KERNEL_OK")
</pallas_src>

<mosaic_0001>
module attributes {stable_mosaic.version = 11 : i64} {
  func.func @_add_pe_kernel(%arg0: i32, %arg1: memref<2x1x256xf32, #tpu.memory_space<vmem>>, %arg2: memref<1x256xf32, #tpu.memory_space<vmem>>, %arg3: memref<2x1x256xf32, #tpu.memory_space<vmem>>) attributes {dimension_semantics = [#tpu.dimension_semantics<parallel>], iteration_bounds = array<i64: 1>, scalar_prefetch = 0 : i64, scratch_operands = 0 : i64, tpu.core_type = #tpu.core_type<tc>, window_params = [{transform_indices = @transform_0, window_bounds = array<i64: 2, 1, 256>}, {transform_indices = @transform_1, window_bounds = array<i64: 1, 256>}, {transform_indices = @transform_2, window_bounds = array<i64: 2, 1, 256>}]} {
    %c0 = arith.constant 0 : index
    %c0_0 = arith.constant 0 : index
    %c0_1 = arith.constant 0 : index
    %0 = vector.load %arg1[%c0, %c0_0, %c0_1] : memref<2x1x256xf32, #tpu.memory_space<vmem>>, vector<2x1x256xf32>
    %c0_2 = arith.constant 0 : index
    %c0_3 = arith.constant 0 : index
    %1 = vector.load %arg2[%c0_2, %c0_3] : memref<1x256xf32, #tpu.memory_space<vmem>>, vector<1x256xf32>
    %2 = vector.shape_cast %1 : vector<1x256xf32> to vector<1x1x256xf32>
    %3 = vector.broadcast %2 : vector<1x1x256xf32> to vector<2x1x256xf32>
    %4 = arith.addf %0, %3 : vector<2x1x256xf32>
    %c0_4 = arith.constant 0 : index
    %c0_5 = arith.constant 0 : index
    %c0_6 = arith.constant 0 : index
    %5 = vector.load %arg3[%c0_4, %c0_5, %c0_6] : memref<2x1x256xf32, #tpu.memory_space<vmem>>, vector<2x1x256xf32>
    tpu.vector_store %arg3[%c0_4, %c0_5, %c0_6], %4 {strides = array<i32>} : memref<2x1x256xf32, #tpu.memory_space<vmem>>, vector<2x1x256xf32>,
    return
  }
  func.func @transform_0(%arg0: i32) -> (i32, i32, i32) {
    %c0_i32 = arith.constant 0 : i32
    %c0_i32_0 = arith.constant 0 : i32
    %c0_i32_1 = arith.constant 0 : i32
    return %c0_i32, %c0_i32_0, %arg0 : i32, i32, i32
  }
  func.func @transform_1(%arg0: i32) -> (i32, i32) {
    %c0_i32 = arith.constant 0 : i32
    %c0_i32_0 = arith.constant 0 : i32
    return %c0_i32, %arg0 : i32, i32
  }
  func.func @transform_2(%arg0: i32) -> (i32, i32, i32) {
    %c0_i32 = arith.constant 0 : i32
    %c0_i32_0 = arith.constant 0 : i32
    %c0_i32_1 = arith.constant 0 : i32
    return %c0_i32, %c0_i32_0, %arg0 : i32, i32, i32
  }
}

</mosaic_0001>

<llo_original>
// kernel: tpu_custom_call.1
$region0: #{tpu_custom_call.1}
  #allocation0 [shape = 'u32[]', space=smem, size = 0x4, offset = 0x4, fixed_abs, tag = 'smem constant byte address 0x4 - core index']
  #allocation1 [shape = 'u32[72,128]{1,0:T(1,128)}', space=vmem, size = 0x9000, scoped, tag = 'internal scratch']
  %s0 = inlined_call_operand.hbm [shape: f32[2,1,256], index: 0, kind: input, shape index: {}]
  %s1 = inlined_call_operand.hbm [shape: f32[1,6400000], index: 1, kind: input, shape index: {}]
  %s2 = inlined_call_operand.hbm [shape: f32[2,1,256], index: 2, kind: output, shape index: {}]
  %s3 = sld [smem:[#allocation0]]
  $region26: #{tpu_custom_call.1} parent=0
    _
  %s5 = ssub.s32 1, %s3
  %s6 = scalar_select 0, %s5, %s3
  $region1: #{tpu_custom_call.1} parent=0
    #allocation2 [shape = 'u8[2048]{0}', space=vmem, size = 0x800, scoped, tag = 'input window, operand 0, single buffered']
    #allocation3 [shape = 's32[1]{0}', space=sflag, size = 0x4, scoped, tag = 'scoped memory for tpu_custom_call.1']
    #allocation4 [shape = 's32[1]{0}', space=sflag, size = 0x4, scoped, tag = 'scoped memory for tpu_custom_call.1']
    #allocation5 [shape = 'u8[1024]{0}', space=vmem, size = 0x400, scoped, tag = 'input window, operand 1, single buffered']
    #allocation6 [shape = 's32[1]{0}', space=sflag, size = 0x4, scoped, tag = 'scoped memory for tpu_custom_call.1']
    #allocation7 [shape = 'u8[2048]{0}', space=vmem, size = 0x800, scoped, tag = 'output window, operand 0, single buffered']
    %7 = vsyncpa [#allocation3], 0
    %8 = vsyncpa [#allocation6], 0
    %9 = vsyncpa [#allocation4], 0
    // Predicated region
    $region2: #{tpu_custom_call.1} parent=1 // pred_check
      _
    $region3: #{tpu_custom_call.1} parent=1 // pred_check_branch
      %11 = sbr.rel (0) target = $region5
    $region4: #{tpu_custom_call.1} parent=1 // pred_region
      %13 = vsyncadd [#allocation3], 0
      %s14 = sshll.u32 %s0, 4
      %s15 = int_to_ptr.hbm [resolvable:$true] %s14
      %s16 = sshll.u32 [#allocation2], 4
      %s17 = int_to_ptr.vmem [resolvable:$true] %s16
      %22 = dma.hbm_to_vmem [thread:$0]  %s15, 64, %s17, [#allocation3], 32, 32, 2
    $region5: #{tpu_custom_call.1} parent=1 // pred_fallthru
      _
    // Predicated region
    $region6: #{tpu_custom_call.1} parent=1 // pred_check
      _
    $region7: #{tpu_custom_call.1} parent=1 // pred_check_branch
      %24 = sbr.rel (0) target = $region9
    $region8: #{tpu_custom_call.1} parent=1 // pred_region
      %26 = vsyncadd [#allocation6], 0
      %s28 = sshll.u32 %s1, 4
      %s29 = int_to_ptr.hbm [resolvable:$true] %s28
      %s30 = sshll.u32 [#allocation5], 4
      %s31 = int_to_ptr.vmem [resolvable:$true] %s30
      %33 = dma.hbm_to_vmem [thread:$0]  %s29, 32, %s31, [#allocation6]
    $region9: #{tpu_custom_call.1} parent=1 // pred_fallthru
      _
    // Predicated region
    $region10: #{tpu_custom_call.1} parent=1 // pred_check
      _
    $region11: #{tpu_custom_call.1} parent=1 // pred_check_branch
      %35 = sbr.rel (0) target = $region13
    $region12: #{tpu_custom_call.1} parent=1 // pred_region
      %37 = dma.done [#allocation3], 64
    $region13: #{tpu_custom_call.1} parent=1 // pred_fallthru
      _
    // Predicated region
    $region14: #{tpu_custom_call.1} parent=1 // pred_check
      _
    $region15: #{tpu_custom_call.1} parent=1 // pred_check_branch
      %39 = sbr.rel (0) target = $region17
    $region16: #{tpu_custom_call.1} parent=1 // pred_region
      %41 = dma.done [#allocation6], 32
    $region17: #{tpu_custom_call.1} parent=1 // pred_fallthru
      _
    %v42 = vld [vmem:[#allocation2] sm:$0x3]
    %v43 = vld [vmem:[#allocation2 + $0x2] sm:$0x3]
    %v44 = vld [vmem:[#allocation5] sm:$0x3]
    %v45 = vadd.f32 %v42, %v44
    %v46 = vadd.f32 %v43, %v44
    %v47 = vlaneseq
    %vm48 = vcmp.ge.s32.totalorder %v47, 0
    %vm49 = vcmp.lt.s32.totalorder %v47, 256
    %vm50 = vmand %vm48, %vm49
    %51 = vst.msk [vmem:[#allocation7] sm:$0x3] %vm50, %v45
    %52 = vst.msk [vmem:[#allocation7 + $0x2] sm:$0x3] %vm50, %v46
    // Predicated region
    $region18: #{tpu_custom_call.1} parent=1 // pred_check
      _
    $region19: #{tpu_custom_call.1} parent=1 // pred_check_branch
      %54 = sbr.rel (0) target = $region21
    $region20: #{tpu_custom_call.1} parent=1 // pred_region
      %56 = vsyncadd [#allocation4], 0
      %s57 = sshll.u32 [#allocation7], 4
      %s58 = int_to_ptr.vmem [resolvable:$true] %s57
      %s59 = sshll.u32 %s2, 4
      %s60 = int_to_ptr.hbm [resolvable:$true] %s59
      %65 = dma.vmem_to_hbm [thread:$0]  %s58, 64, %s60, [#allocation4], 32, 32, 2
    $region21: #{tpu_custom_call.1} parent=1 // pred_fallthru
      _
    // Predicated region
    $region22: #{tpu_custom_call.1} parent=1 // pred_check
      _
    $region23: #{tpu_custom_call.1} parent=1 // pred_check_branch
      %67 = sbr.rel (0) target = $region25
    $region24: #{tpu_custom_call.1} parent=1 // pred_region
      %69 = dma.done [#allocation4], 64
    $region25: #{tpu_custom_call.1} parent=1 // pred_fallthru
      _
    %70 = vsyncpa [#allocation3], 1
    %71 = vsyncpa [#allocation6], 1
    %72 = vsyncpa [#allocation4], 1

</llo_original>
